<compile_context>
chip_gen: v5e
topology: v5e:2x2
jax: 0.10.0
libtpu: 0.0.40
codegen_flags: <defaults>
</compile_context>

<pallas_src>
import functools

import jax
import jax.numpy as jnp
from jax import lax
from jax.experimental import pallas as pl
from jax.experimental.pallas import tpu as pltpu


def _round_up(n, m):
    return ((n + m - 1) // m) * m


def _largest_divisor(n, cap, align=1):
    """Largest d <= cap with n % d == 0 and d % align == 0 (>= 1)."""
    cap = max(1, min(cap, n))
    for d in range(cap, 0, -1):
        if n % d == 0 and d % align == 0:
            return d
    return n


def _vmem_limit_bytes(fraction=0.75):
    """Generation-aware VMEM budget: ~48 MiB on v7x (64 MiB/TC), ~96 MiB on v5e/v6e (128 MiB/TC)."""
    cap = 64 * 1024 * 1024                      # conservative fallback = v7x per-TensorCore VMEM
    try:
        cap = int(pltpu.get_tpu_info().vmem_capacity_bytes)
    except Exception:
        pass
    return int(cap * fraction)


def _sigmoid(x):
    # tanh-form sigmoid: one EUP push (tanh) instead of exp + reciprocal.
    return 0.5 * jnp.tanh(0.5 * x) + 0.5


# ----------------------------------------------------------------------------------------------
# Hoisted, time-parallel input projection: x_proj = x @ W_ih + (b_ih + b_hh)
# ----------------------------------------------------------------------------------------------
def _input_proj_kernel(x_ref, w_ref, b_ref, o_ref):
    # bf16 operands on the MXU, f32 accumulate, bf16 store (x_proj is only re-read by the
    # recurrence kernel, which upcasts before the gate nonlinearities).
    acc = jnp.dot(x_ref[...].astype(jnp.bfloat16), w_ref[...],
                  preferred_element_type=jnp.float32)
    o_ref[...] = (acc + b_ref[...]).astype(o_ref.dtype)


def input_projection(x, w_ih, b, *, row_block=512, col_block=2048):
    """Projection over the whole sequence as a row/col-blocked (T*B, D) @ (D, 4H) matmul.

    Rows are padded up to a multiple of the row block (cheap, time-parallel, tail sliced off)
    instead of hunting for tiny divisors of T*B.
    """
    T, B, D = x.shape
    G = w_ih.shape[1]
    rows = T * B
    x2 = x.reshape(rows, D)

    rb = min(row_block, _round_up(rows, 8))
    rows_p = _round_up(rows, rb)
    if rows_p != rows:
        x2 = jnp.pad(x2, ((0, rows_p - rows), (0, 0)))
    # Tile the 4H axis only when it is large, keeping the output store lane-dense.
    cb = G if G <= col_block else _largest_divisor(G, col_block, align=128)

    out = pl.pallas_call(
        _input_proj_kernel,
        out_shape=jax.ShapeDtypeStruct((rows_p, G), jnp.bfloat16),
        grid_spec=pltpu.PrefetchScalarGridSpec(
            num_scalar_prefetch=0,
            grid=(rows_p // rb, G // cb),
            in_specs=[pl.BlockSpec((rb, D), lambda i, j: (i, 0)),
                      # Constant-index weight/bias blocks.
                      # TODO(synk): pipeline_mode=pl.Buffered(1) would halve their VMEM footprint.
                      pl.BlockSpec((D, cb), lambda i, j: (0, j)),
                      pl.BlockSpec((1, cb), lambda i, j: (0, j))],
            out_specs=pl.BlockSpec((rb, cb), lambda i, j: (i, j)),
        ),
        compiler_params=pltpu.CompilerParams(
            dimension_semantics=("parallel", "parallel"),
            vmem_limit_bytes=_vmem_limit_bytes()),
    )(x2, w_ih, b)
    if rows_p != rows:
        out = out[:rows]
    return out.reshape(T, B, G)


# ----------------------------------------------------------------------------------------------
# Serial TLSTM recurrence: Tb timesteps per grid step, h/c carried as fori_loop values (vregs).
# ----------------------------------------------------------------------------------------------
def _tlstm_recurrence_kernel(*refs, hidden_size, t_block, unroll, fused):
    H = hidden_size
    if fused:
        (xp_ref, dec_ref, w_ref, bdec_ref, h0_ref, c0_ref,
         out_ref, hn_ref, cn_ref, h_sc, c_sc) = refs
    else:
        (xp_ref, dec_ref, whh_ref, wdec_ref, bdec_ref, h0_ref, c0_ref,
         out_ref, hn_ref, cn_ref, h_sc, c_sc) = refs

    t = pl.program_id(1)

    @pl.when(t == 0)
    def _():
        h_sc[...] = h0_ref[...]
        c_sc[...] = c0_ref[...]

    b_dec = bdec_ref[...]        # hoisted: read once per time block

    def step(tt, carry):
        h, c = carry
        h16 = h.astype(jnp.bfloat16)
        c16 = c.astype(jnp.bfloat16)
        if fused:
            # One MXU push per step: [h | c] @ [[W_hh, 0], [0, W_decomp]].
            # The lane-axis concat at a 128-aligned boundary is vreg renaming, not data movement.
            hc = jnp.concatenate([h16, c16], axis=1)
            comb = jnp.dot(hc, w_ref[...], preferred_element_type=jnp.float32)   # (Bb, 5H)
            gate_pre, cst_pre = comb[:, :4 * H], comb[:, 4 * H:]
        else:
            gate_pre = jnp.dot(h16, whh_ref[...], preferred_element_type=jnp.float32)
            cst_pre = jnp.dot(c16, wdec_ref[...], preferred_element_type=jnp.float32)

        # TLSTM memory decomposition (Baytas et al.):
        #   c_adj = c - C_s + decay * C_s = c + (decay - 1) * C_s   ((decay-1) folded in wrapper)
        c_st = jnp.tanh(cst_pre + b_dec)
        c_adj = c + dec_ref[tt] * c_st

        gates = xp_ref[tt].astype(jnp.float32) + gate_pre          # (Bb, 4H)
        i_g = _sigmoid(gates[:, 0 * H:1 * H])
        f_g = _sigmoid(gates[:, 1 * H:2 * H])
        g_g = jnp.tanh(gates[:, 2 * H:3 * H])
        o_g = _sigmoid(gates[:, 3 * H:4 * H])

        cy = f_g * c_adj + i_g * g_g
        hy = o_g * jnp.tanh(cy)
        out_ref[tt] = hy
        return hy, cy

    # Partially unrolled so loads/stores/EUP pushes of adjacent steps interleave around the
    # h/c dependency (a fully rolled loop hides everything from the LLO scheduler).
    h_fin, c_fin = lax.fori_loop(0, t_block, step, (h_sc[...], c_sc[...]),
                                 unroll=unroll)
    # Carry written back to VMEM once per Tb-block (not once per timestep).
    h_sc[...] = h_fin
    c_sc[...] = c_fin

    @pl.when(t == pl.num_programs(1) - 1)
    def _():
        hn_ref[...] = h_fin
        cn_ref[...] = c_fin


def tlstm_recurrence(x_proj, decay_m1, w_hh, w_dec, b_dec, h0, c0, *,
                     time_block=32, batch_block=None, fuse_threshold=256):
    """One TLSTM layer recurrence.  x_proj: (T, B, 4H) bf16, decay_m1: (T, B, 1) f32."""
    T, B, G = x_proj.shape
    H = G // 4

    # No batch split by default: on single-TensorCore v5e/v6e it is a pure-overhead serial loop.
    # TODO(synk): on v7x shard the batch axis across both TCs with pltpu.CORE_PARALLEL / core_map
    # when B//2 is large enough.
    Bb = B if batch_block is None else batch_block
    assert B % Bb == 0 and (Bb % 8 == 0 or Bb == B)
    nb = B // Bb

    vmem_budget = _vmem_limit_bytes()
    # VMEM-aware time block: xp (bf16) + out (f32) + lane-padded decay are all double-buffered.
    per_step_bytes = Bb * (4 * H * 2 * 2 + H * 4 * 2 + 128 * 4 * 2)
    tb_cap = max(1, (vmem_budget // 2) // per_step_bytes)
    Tb = _largest_divisor(T, min(time_block, tb_cap))
    # TODO(synk): for awkward (prime) T, pad the time axis + capture h_n/c_n at the true last step
    # instead of falling back to small divisors.
    nt = T // Tb

    fused = H <= fuse_threshold
    if fused:
        # Block-diagonal fusion: [h | c] @ [[W_hh, 0], [0, W_dec]] -> one MXU push per step.
        # Only worth it at small H (K=2H fills the MXU); at large H the baked zeros would double
        # weight VMEM/DMA/MACs, so keep the two weights separate (two dots) instead.
        w_comb = jnp.zeros((2 * H, 5 * H), jnp.bfloat16)
        w_comb = w_comb.at[:H, :4 * H].set(w_hh)
        w_comb = w_comb.at[H:, 4 * H:].set(w_dec)
        weight_args = (w_comb,)
        weight_specs = [pl.BlockSpec((2 * H, 5 * H), lambda b, t: (0, 0))]
    else:
        weight_args = (w_hh, w_dec)
        weight_specs = [pl.BlockSpec((H, 4 * H), lambda b, t: (0, 0)),
                        pl.BlockSpec((H, H), lambda b, t: (0, 0))]

    kernel = functools.partial(_tlstm_recurrence_kernel, hidden_size=H,
                               t_block=Tb, unroll=min(Tb, 8), fused=fused)
    out, hn, cn = pl.pallas_call(
        kernel,
        out_shape=(jax.ShapeDtypeStruct((T, B, H), jnp.float32),
                   jax.ShapeDtypeStruct((B, H), jnp.float32),
                   jax.ShapeDtypeStruct((B, H), jnp.float32)),
        grid_spec=pltpu.PrefetchScalarGridSpec(
            num_scalar_prefetch=0,
            grid=(nb, nt),                                           # (batch, serial time)
            in_specs=[
                pl.BlockSpec((Tb, Bb, G), lambda b, t: (t, b, 0)),   # x @ W_ih + bias  (bf16)
                pl.BlockSpec((Tb, Bb, 1), lambda b, t: (t, b, 0)),   # decay - 1        (f32)
                *weight_specs,                                       # recurrent weights (bf16)
                # TODO(synk): pipeline_mode=pl.Buffered(1) on the constant-index blocks below
                # would halve their VMEM allocation for large H.
                pl.BlockSpec((1, H), lambda b, t: (0, 0)),           # b_decomp
                pl.BlockSpec((Bb, H), lambda b, t: (b, 0)),          # h0
                pl.BlockSpec((Bb, H), lambda b, t: (b, 0)),          # c0
            ],
            out_specs=[
                pl.BlockSpec((Tb, Bb, H), lambda b, t: (t, b, 0)),   # per-step hidden output
                pl.BlockSpec((Bb, H), lambda b, t: (b, 0)),          # h_n (written on last block)
                pl.BlockSpec((Bb, H), lambda b, t: (b, 0)),          # c_n (written on last block)
            ],
            scratch_shapes=[pltpu.VMEM((Bb, H), jnp.float32),
                            pltpu.VMEM((Bb, H), jnp.float32)],
        ),
        compiler_params=pltpu.CompilerParams(
            dimension_semantics=("parallel", "arbitrary"),
            vmem_limit_bytes=vmem_budget),
    )(x_proj, decay_m1, *weight_args, b_dec, h0, c0)
    return out, (hn, cn)


# ----------------------------------------------------------------------------------------------
# StackedLSTM.forward
# ----------------------------------------------------------------------------------------------
def stacked_tlstm(x, timestamps, layer_params, states=None, *,
                  time_block=32, batch_block=None):
    """Feed each layer's output into the next; stack final (h, c) states."""
    T, B, _ = x.shape
    # Layer-invariant time decay, computed once (time-parallel) outside the serial recurrence,
    # with the "-1" of c_adj = c + (decay-1)*C_s pre-folded (one fewer VPU op per serial step).
    # Assumes timestamps are elapsed times > 0 (as in the reference TLSTM).
    decay_m1 = 1.0 / jnp.log(timestamps + 2.7183) - 1.0
    output = x
    output_states = []
    for i, (w_ih, b, w_hh, w_dec, b_dec) in enumerate(layer_params):
        H = w_hh.shape[0]
        if states is None:
            h0 = jnp.zeros((B, H), jnp.float32)
            c0 = jnp.zeros((B, H), jnp.float32)
        else:
            h0, c0 = states[i]
        x_proj = input_projection(output, w_ih, b)       # hoisted out of the serial loop
        output, st = tlstm_recurrence(x_proj, decay_m1, w_hh, w_dec, b_dec, h0, c0,
                                      time_block=time_block, batch_block=batch_block)
        output_states.append(st)
    hn = jnp.stack([s[0] for s in output_states])        # (num_layers, B, H)
    cn = jnp.stack([s[1] for s in output_states])        # (num_layers, B, H)
    return output, (hn, cn)


def init_tlstm_params(key, input_size, hidden_size):
    """Synthetic params mirroring TLSTMCell's Parameter shapes (pre-transposed, MXU-friendly dtypes).

    Weights are stored bf16 (native MXU dtype); biases and all state math stay f32.
    Gate order along the 4H axis matches torch chunk(4, 1): [input, forget, cell, output].
    """
    H = hidden_size
    k = jax.random.split(key, 6)
    s = 1.0 / jnp.sqrt(jnp.float32(H))
    w_ih = (s * jax.random.normal(k[0], (input_size, 4 * H), jnp.float32)).astype(jnp.bfloat16)
    w_hh = (s * jax.random.normal(k[1], (H, 4 * H), jnp.float32)).astype(jnp.bfloat16)
    # bias_ih + bias_hh folded into a single row (they only ever appear summed).
    b = s * (jax.random.normal(k[2], (1, 4 * H), jnp.float32)
             + jax.random.normal(k[3], (1, 4 * H), jnp.float32))
    w_dec = (s * jax.random.normal(k[4], (H, H), jnp.float32)).astype(jnp.bfloat16)
    b_dec = s * jax.random.normal(k[5], (1, H), jnp.float32)
    return (w_ih, b, w_hh, w_dec, b_dec)


def stacked_tlstm_reference(x, timestamps, layer_params, states=None):
    """Pure-JAX f32 reference of the PyTorch StackedLSTM/TLSTMCell forward (for validation)."""
    T, B, _ = x.shape
    decay = 1.0 / jnp.log(timestamps + 2.7183)
    hp = jax.lax.Precision.HIGHEST
    output = x
    hs, cs = [], []
    for i, (w_ih, b, w_hh, w_dec, b_dec) in enumerate(layer_params):
        H = w_hh.shape[0]
        w_ih = w_ih.astype(jnp.float32)
        w_hh = w_hh.astype(jnp.float32)
        w_dec = w_dec.astype(jnp.float32)
        if states is None:
            h = jnp.zeros((B, H), jnp.float32)
            c = jnp.zeros((B, H), jnp.float32)
        else:
            h, c = states[i]
        outs = []
        for t in range(T):
            c_st = jnp.tanh(jnp.dot(c, w_dec, precision=hp) + b_dec)
            c_adj = c - c_st + decay[t] * c_st
            gates = (jnp.dot(output[t], w_ih, precision=hp) + b
                     + jnp.dot(h, w_hh, precision=hp))
            i_g = jax.nn.sigmoid(gates[:, 0 * H:1 * H])
            f_g = jax.nn.sigmoid(gates[:, 1 * H:2 * H])
            g_g = jnp.tanh(gates[:, 2 * H:3 * H])
            o_g = jax.nn.sigmoid(gates[:, 3 * H:4 * H])
            c = f_g * c_adj + i_g * g_g
            h = o_g * jnp.tanh(c)
            outs.append(h)
        output = jnp.stack(outs)
        hs.append(h)
        cs.append(c)
    return output, (jnp.stack(hs), jnp.stack(cs))


if __name__ == "__main__":
    # Small but vreg/MXU-friendly shapes: B multiple of 8 (f32 sublanes), H multiple of 128 (lanes).
    num_layers, T, B, D, H = 2, 16, 8, 64, 128
    key = jax.random.PRNGKey(0)
    k_x, k_t, k_p0, k_p1 = jax.random.split(key, 4)

    x = jax.random.normal(k_x, (T, B, D), jnp.float32)                 # time-major input
    timestamps = jax.random.uniform(k_t, (T, B, 1), jnp.float32,       # elapsed times > 0
                                    minval=0.1, maxval=5.0)

    # First layer: (input_size, hidden_size); other layers: (hidden_size, hidden_size).
    layer_params = [init_tlstm_params(k_p0, D, H),
                    init_tlstm_params(k_p1, H, H)]

    output, (hn, cn) = stacked_tlstm(x, timestamps, layer_params, states=None)
    jax.block_until_ready((output, hn, cn))

    assert output.shape == (T, B, H)
    assert hn.shape == (num_layers, B, H) and cn.shape == (num_layers, B, H)

    # Validate against a pure-JAX f32 reference of the PyTorch forward.  The kernel feeds the MXU
    # bf16 operands (f32 accumulation, f32 state/elementwise), so the tolerance reflects bf16
    # activation rounding compounded over T steps and 2 layers.
    ref_out, (ref_hn, ref_cn) = stacked_tlstm_reference(x, timestamps, layer_params)
    err_max = max(float(jnp.max(jnp.abs(output - ref_out))),
                  float(jnp.max(jnp.abs(hn - ref_hn))),
                  float(jnp.max(jnp.abs(cn - ref_cn))))
    err_mean = float(jnp.mean(jnp.abs(output - ref_out)))
    assert err_max < 1e-1 and err_mean < 1e-2, \
        f"mismatch vs reference: max abs err {err_max}, mean abs err {err_mean}"

    print("KERNEL_OK")
</pallas_src>

<mosaic_0001>
module attributes {stable_mosaic.version = 11 : i64} {
  func.func @_input_proj_kernel(%arg0: i32, %arg1: i32, %arg2: memref<128x64xf32, #tpu.memory_space<vmem>>, %arg3: memref<64x512xbf16, #tpu.memory_space<vmem>>, %arg4: memref<1x512xf32, #tpu.memory_space<vmem>>, %arg5: memref<128x512xbf16, #tpu.memory_space<vmem>>) attributes {dimension_semantics = [#tpu.dimension_semantics<parallel>, #tpu.dimension_semantics<parallel>], iteration_bounds = array<i64: 1, 1>, scalar_prefetch = 0 : i64, scratch_operands = 0 : i64, tpu.core_type = #tpu.core_type<tc>, window_params = [{transform_indices = @transform_0, window_bounds = array<i64: 128, 64>}, {transform_indices = @transform_1, window_bounds = array<i64: 64, 512>}, {transform_indices = @transform_2, window_bounds = array<i64: 1, 512>}, {transform_indices = @transform_3, window_bounds = array<i64: 128, 512>}]} {
    %c0 = arith.constant 0 : index
    %c0_0 = arith.constant 0 : index
    %0 = vector.load %arg2[%c0, %c0_0] : memref<128x64xf32, #tpu.memory_space<vmem>>, vector<128x64xf32>
    %1 = arith.truncf %0 : vector<128x64xf32> to vector<128x64xbf16>
    %c0_1 = arith.constant 0 : index
    %c0_2 = arith.constant 0 : index
    %2 = vector.load %arg3[%c0_1, %c0_2] : memref<64x512xbf16, #tpu.memory_space<vmem>>, vector<64x512xbf16>
    %cst = arith.constant dense<0.000000e+00> : vector<128x512xf32>
    %3 = tpu.matmul %1, %2, %cst {dimension_numbers = #tpu.dot_dimension_numbers<[1], [0], [0], [1], [0, 0, 1, 1], [], []>} : vector<128x64xbf16>, vector<64x512xbf16>, vector<128x512xf32> -> vector<128x512xf32>
    %c0_3 = arith.constant 0 : index
    %c0_4 = arith.constant 0 : index
    %4 = vector.load %arg4[%c0_3, %c0_4] : memref<1x512xf32, #tpu.memory_space<vmem>>, vector<1x512xf32>
    %5 = vector.broadcast %4 : vector<1x512xf32> to vector<128x512xf32>
    %6 = arith.addf %3, %5 : vector<128x512xf32>
    %7 = arith.truncf %6 : vector<128x512xf32> to vector<128x512xbf16>
    %c0_5 = arith.constant 0 : index
    %c0_6 = arith.constant 0 : index
    %8 = vector.load %arg5[%c0_5, %c0_6] : memref<128x512xbf16, #tpu.memory_space<vmem>>, vector<128x512xbf16>
    tpu.vector_store %arg5[%c0_5, %c0_6], %7 {strides = array<i32>} : memref<128x512xbf16, #tpu.memory_space<vmem>>, vector<128x512xbf16>,
    return
  }
  func.func @transform_0(%arg0: i32, %arg1: i32) -> (i32, i32) {
    %c0_i32 = arith.constant 0 : i32
    %c0_i32_0 = arith.constant 0 : i32
    return %arg0, %c0_i32 : i32, i32
  }
  func.func @transform_1(%arg0: i32, %arg1: i32) -> (i32, i32) {
    %c0_i32 = arith.constant 0 : i32
    %c0_i32_0 = arith.constant 0 : i32
    return %c0_i32, %arg1 : i32, i32
  }
  func.func @transform_2(%arg0: i32, %arg1: i32) -> (i32, i32) {
    %c0_i32 = arith.constant 0 : i32
    %c0_i32_0 = arith.constant 0 : i32
    return %c0_i32, %arg1 : i32, i32
  }
  func.func @transform_3(%arg0: i32, %arg1: i32) -> (i32, i32) {
    %c0_i32 = arith.constant 0 : i32
    return %arg0, %arg1 : i32, i32
  }
}

</mosaic_0001>

<llo_original>
// kernel: tpu_custom_call.1
$region0: #{tpu_custom_call.1}
  #allocation0 [shape = 'u32[]', space=smem, size = 0x4, offset = 0x4, fixed_abs, tag = 'smem constant byte address 0x4 - core index']
  #allocation1 [shape = 'u32[72,128]{1,0:T(1,128)}', space=vmem, size = 0x9000, scoped, tag = 'internal scratch']
  %s0 = inlined_call_operand.vmem [shape: f32[128,64], index: 0, kind: input, shape index: {}]
  %s1 = inlined_call_operand.vmem [shape: bf16[64,512], index: 1, kind: input, shape index: {}]
  %s2 = inlined_call_operand.vmem [shape: f32[1,512], index: 2, kind: input, shape index: {}]
  %s3 = inlined_call_operand.hbm [shape: bf16[128,512], index: 3, kind: output, shape index: {}]
  %s4 = sld [smem:[#allocation0]]
  $region22: #{tpu_custom_call.1} parent=0
    _
  %s6 = ssub.s32 1, %s4
  %s7 = scalar_select 0, %s6, %s4
  $region1: #{tpu_custom_call.1} parent=0
    #allocation2 [shape = 'u8[131072]{0}', space=vmem, size = 0x20000, scoped, tag = 'output window, operand 0, single buffered']
    #allocation3 [shape = 's32[1]{0}', space=sflag, size = 0x4, scoped, tag = 'scoped memory for tpu_custom_call.1']
    %8 = vsyncpa [#allocation3], 0
    // Predicated region
    $region2: #{tpu_custom_call.1} parent=1 // pred_check
      _
    $region3: #{tpu_custom_call.1} parent=1 // pred_check_branch
      %10 = sbr.rel (0) target = $region5
    $region4: #{tpu_custom_call.1} parent=1 // pred_region
      _
    $region5: #{tpu_custom_call.1} parent=1 // pred_fallthru
      _
    // Predicated region
    $region6: #{tpu_custom_call.1} parent=1 // pred_check
      _
    $region7: #{tpu_custom_call.1} parent=1 // pred_check_branch
      %12 = sbr.rel (0) target = $region9
    $region8: #{tpu_custom_call.1} parent=1 // pred_region
      _
    $region9: #{tpu_custom_call.1} parent=1 // pred_fallthru
      _
    // Predicated region
    $region10: #{tpu_custom_call.1} parent=1 // pred_check
      _
    $region11: #{tpu_custom_call.1} parent=1 // pred_check_branch
      %14 = sbr.rel (0) target = $region13
    $region12: #{tpu_custom_call.1} parent=1 // pred_region
      _
    $region13: #{tpu_custom_call.1} parent=1 // pred_fallthru
      _
    %v16 = vld [vmem:[%s0] sm:$0xff]
    %v17 = vld [vmem:[%s0 + $0x8] sm:$0xff]
    %v18 = vld [vmem:[%s0 + $0x10] sm:$0xff]
    %v19 = vld [vmem:[%s0 + $0x18] sm:$0xff]
    %v20 = vld [vmem:[%s0 + $0x20] sm:$0xff]
    %v21 = vld [vmem:[%s0 + $0x28] sm:$0xff]
    %v22 = vld [vmem:[%s0 + $0x30] sm:$0xff]
    %v23 = vld [vmem:[%s0 + $0x38] sm:$0xff]
    %v24 = vld [vmem:[%s0 + $0x40] sm:$0xff]
    %v25 = vld [vmem:[%s0 + $0x48] sm:$0xff]
    %v26 = vld [vmem:[%s0 + $0x50] sm:$0xff]
    %v27 = vld [vmem:[%s0 + $0x58] sm:$0xff]
    %v28 = vld [vmem:[%s0 + $0x60] sm:$0xff]
    %v29 = vld [vmem:[%s0 + $0x68] sm:$0xff]
    %v30 = vld [vmem:[%s0 + $0x70] sm:$0xff]
    %v31 = vld [vmem:[%s0 + $0x78] sm:$0xff]
    %v32 = vpack.c.bf16 %v17, %v16
    %v33 = vpack.c.bf16 %v19, %v18
    %v34 = vpack.c.bf16 %v21, %v20
    %v35 = vpack.c.bf16 %v23, %v22
    %v36 = vpack.c.bf16 %v25, %v24
    %v37 = vpack.c.bf16 %v27, %v26
    %v38 = vpack.c.bf16 %v29, %v28
    %v39 = vpack.c.bf16 %v31, %v30
    %v40 = vld [vmem:[%s1] sm:$0xff]
    %v41 = vld [vmem:[%s1 + $0x8] sm:$0xff]
    %v42 = vld [vmem:[%s1 + $0x10] sm:$0xff]
    %v43 = vld [vmem:[%s1 + $0x18] sm:$0xff]
    %v44 = vld [vmem:[%s1 + $0x20] sm:$0xff]
    %v45 = vld [vmem:[%s1 + $0x28] sm:$0xff]
    %v46 = vld [vmem:[%s1 + $0x30] sm:$0xff]
    %v47 = vld [vmem:[%s1 + $0x38] sm:$0xff]
    %v48 = vld [vmem:[%s1 + $0x40] sm:$0xff]
    %v49 = vld [vmem:[%s1 + $0x48] sm:$0xff]
    %v50 = vld [vmem:[%s1 + $0x50] sm:$0xff]
    %v51 = vld [vmem:[%s1 + $0x58] sm:$0xff]
    %v52 = vld [vmem:[%s1 + $0x60] sm:$0xff]
    %v53 = vld [vmem:[%s1 + $0x68] sm:$0xff]
    %v54 = vld [vmem:[%s1 + $0x70] sm:$0xff]
    %v55 = vld [vmem:[%s1 + $0x78] sm:$0xff]
    %v56 = vld [vmem:[%s2] sm:$0xf]
    %v58 = vperm.slane %v56, 0
    %v59 = vperm.slane %v56, 1
    %v60 = vperm.slane %v56, 2
    %v61 = vperm.slane %v56, 3
    %v82 = vunpack.c.l.b16 %v40
    %v83 = vunpack.c.h.b16 %v40
    %v84 = vunpack.c.l.b16 %v41
    %v85 = vunpack.c.h.b16 %v41
    %v86 = vunpack.c.l.b16 %v42
    %v87 = vunpack.c.h.b16 %v42
    %v88 = vunpack.c.l.b16 %v43
    %v89 = vunpack.c.h.b16 %v43
    %v90 = vunpack.c.l.b16 %v44
    %v91 = vunpack.c.h.b16 %v44
    %v92 = vunpack.c.l.b16 %v45
    %v93 = vunpack.c.h.b16 %v45
    %v94 = vunpack.c.l.b16 %v46
    %v95 = vunpack.c.h.b16 %v46
    %v96 = vunpack.c.l.b16 %v47
    %v97 = vunpack.c.h.b16 %v47
    %v98 = vunpack.c.l.b16 %v48
    %v99 = vunpack.c.h.b16 %v48
    %v100 = vunpack.c.l.b16 %v49
    %v101 = vunpack.c.h.b16 %v49
    %v102 = vunpack.c.l.b16 %v50
    %v103 = vunpack.c.h.b16 %v50
    %v104 = vunpack.c.l.b16 %v51
    %v105 = vunpack.c.h.b16 %v51
    %v106 = vunpack.c.l.b16 %v52
    %v107 = vunpack.c.h.b16 %v52
    %v108 = vunpack.c.l.b16 %v53
    %v109 = vunpack.c.h.b16 %v53
    %v110 = vunpack.c.l.b16 %v54
    %v111 = vunpack.c.h.b16 %v54
    %v112 = vunpack.c.l.b16 %v55
    %v113 = vunpack.c.h.b16 %v55
    %v114 = vpack.c.b16 %v86, %v82
    %v115 = vpack.c.b16 %v87, %v83
    %v116 = vpack.c.b16 %v88, %v84
    %v117 = vpack.c.b16 %v89, %v85
    %v118 = vpack.c.b16 %v94, %v90
    %v119 = vpack.c.b16 %v95, %v91
    %v120 = vpack.c.b16 %v96, %v92
    %v121 = vpack.c.b16 %v97, %v93
    %v122 = vpack.c.b16 %v102, %v98
    %v123 = vpack.c.b16 %v103, %v99
    %v124 = vpack.c.b16 %v104, %v100
    %v125 = vpack.c.b16 %v105, %v101
    %v126 = vpack.c.b16 %v110, %v106
    %v127 = vpack.c.b16 %v111, %v107
    %v128 = vpack.c.b16 %v112, %v108
    %v129 = vpack.c.b16 %v113, %v109
    %vm146 = vcmask 523264
    %v148 = vsel %vm146, %v32, 0
    %v151 = vsel %vm146, %v33, 0
    %v154 = vsel %vm146, %v34, 0
    %v157 = vsel %vm146, %v35, 0
    %v160 = vsel %vm146, %v36, 0
    %v163 = vsel %vm146, %v37, 0
    %v166 = vsel %vm146, %v38, 0
    %v169 = vsel %vm146, %v39, 0
    %171 = vmatpush.bf16.msra.mxu0 0
    %172 = vmatpush.bf16.msra.mxu0 0
    %173 = vmatpush.bf16.msra.mxu0 0
    %174 = vmatpush.bf16.msra.mxu0 0
    %175 = vmatpush.bf16.msra.mxu0 %v126
    %176 = vmatpush.bf16.msra.mxu0 %v122
    %177 = vmatpush.bf16.msra.mxu0 %v118
    %178 = vmatpush.bf16.msra.mxu0 %v114
    %179 = vmatmul.bf16.gmra.mxu0 %v148
    %v180 = vpop.f32.mrf.mxu0
    %v181 = vadd.f32 %v58, %v180
    %v182 = vpop.f32.mrf.mxu0
    %v183 = vadd.f32 %v58, %v182
    %184 = vmatmul.bf16.gmra.mxu0 %v151
    %v185 = vpop.f32.mrf.mxu0
    %v186 = vadd.f32 %v58, %v185
    %v187 = vpop.f32.mrf.mxu0
    %v188 = vadd.f32 %v58, %v187
    %189 = vmatmul.bf16.gmra.mxu0 %v154
    %v190 = vpop.f32.mrf.mxu0
    %v191 = vadd.f32 %v58, %v190
    %v192 = vpop.f32.mrf.mxu0
    %v193 = vadd.f32 %v58, %v192
    %194 = vmatmul.bf16.gmra.mxu0 %v157
    %v195 = vpop.f32.mrf.mxu0
    %v196 = vadd.f32 %v58, %v195
    %v197 = vpop.f32.mrf.mxu0
    %v198 = vadd.f32 %v58, %v197
    %199 = vmatmul.bf16.gmra.mxu0 %v160
    %v200 = vpop.f32.mrf.mxu0
    %v201 = vadd.f32 %v58, %v200
    %v202 = vpop.f32.mrf.mxu0
    %v203 = vadd.f32 %v58, %v202
    %204 = vmatmul.bf16.gmra.mxu0 %v163
    %v205 = vpop.f32.mrf.mxu0
    %v206 = vadd.f32 %v58, %v205
    %v207 = vpop.f32.mrf.mxu0
    %v208 = vadd.f32 %v58, %v207
    %209 = vmatmul.bf16.gmra.mxu0 %v166
    %v210 = vpop.f32.mrf.mxu0
    %v211 = vadd.f32 %v58, %v210
    %v212 = vpop.f32.mrf.mxu0
    %v213 = vadd.f32 %v58, %v212
    %214 = vmatmul.bf16.gmra.mxu0 %v169
    %v215 = vpop.f32.mrf.mxu0
    %v216 = vadd.f32 %v58, %v215
    %v217 = vpop.f32.mrf.mxu0
    %v218 = vadd.f32 %v58, %v217
    %219 = vdwg.mxu0
    %220 = vmatpush.bf16.msra.mxu0 0
    %221 = vmatpush.bf16.msra.mxu0 0
    %222 = vmatpush.bf16.msra.mxu0 0
    %223 = vmatpush.bf16.msra.mxu0 0
    %224 = vmatpush.bf16.msra.mxu0 %v127
    %225 = vmatpush.bf16.msra.mxu0 %v123
    %226 = vmatpush.bf16.msra.mxu0 %v119
    %227 = vmatpush.bf16.msra.mxu0 %v115
    %228 = vmatmul.bf16.gmra.mxu0 %v148
    %v229 = vpop.f32.mrf.mxu0
    %v230 = vadd.f32 %v59, %v229
    %v231 = vpop.f32.mrf.mxu0
    %v232 = vadd.f32 %v59, %v231
    %233 = vmatmul.bf16.gmra.mxu0 %v151
    %v234 = vpop.f32.mrf.mxu0
    %v235 = vadd.f32 %v59, %v234
    %v236 = vpop.f32.mrf.mxu0
    %v237 = vadd.f32 %v59, %v236
    %238 = vmatmul.bf16.gmra.mxu0 %v154
    %v239 = vpop.f32.mrf.mxu0
    %v240 = vadd.f32 %v59, %v239
    %v241 = vpop.f32.mrf.mxu0
    %v242 = vadd.f32 %v59, %v241
    %243 = vmatmul.bf16.gmra.mxu0 %v157
    %v244 = vpop.f32.mrf.mxu0
    %v245 = vadd.f32 %v59, %v244
    %v246 = vpop.f32.mrf.mxu0
    %v247 = vadd.f32 %v59, %v246
    %248 = vmatmul.bf16.gmra.mxu0 %v160
    %v249 = vpop.f32.mrf.mxu0
    %v250 = vadd.f32 %v59, %v249
    %v251 = vpop.f32.mrf.mxu0
    %v252 = vadd.f32 %v59, %v251
    %253 = vmatmul.bf16.gmra.mxu0 %v163
    %v254 = vpop.f32.mrf.mxu0
    %v255 = vadd.f32 %v59, %v254
    %v256 = vpop.f32.mrf.mxu0
    %v257 = vadd.f32 %v59, %v256
    %258 = vmatmul.bf16.gmra.mxu0 %v166
    %v259 = vpop.f32.mrf.mxu0
    %v260 = vadd.f32 %v59, %v259
    %v261 = vpop.f32.mrf.mxu0
    %v262 = vadd.f32 %v59, %v261
    %263 = vmatmul.bf16.gmra.mxu0 %v169
    %v264 = vpop.f32.mrf.mxu0
    %v265 = vadd.f32 %v59, %v264
    %v266 = vpop.f32.mrf.mxu0
    %v267 = vadd.f32 %v59, %v266
    %268 = vdwg.mxu0
    %269 = vmatpush.bf16.msra.mxu0 0
    %270 = vmatpush.bf16.msra.mxu0 0
    %271 = vmatpush.bf16.msra.mxu0 0
    %272 = vmatpush.bf16.msra.mxu0 0
    %273 = vmatpush.bf16.msra.mxu0 %v128
    %274 = vmatpush.bf16.msra.mxu0 %v124
    %275 = vmatpush.bf16.msra.mxu0 %v120
    %276 = vmatpush.bf16.msra.mxu0 %v116
    %277 = vmatmul.bf16.gmra.mxu0 %v148
    %v278 = vpop.f32.mrf.mxu0
    %v279 = vadd.f32 %v60, %v278
    %v280 = vpop.f32.mrf.mxu0
    %v281 = vadd.f32 %v60, %v280
    %282 = vmatmul.bf16.gmra.mxu0 %v151
    %v283 = vpop.f32.mrf.mxu0
    %v284 = vadd.f32 %v60, %v283
    %v285 = vpop.f32.mrf.mxu0
    %v286 = vadd.f32 %v60, %v285
    %287 = vmatmul.bf16.gmra.mxu0 %v154
    %v288 = vpop.f32.mrf.mxu0
    %v289 = vadd.f32 %v60, %v288
    %v290 = vpop.f32.mrf.mxu0
    %v291 = vadd.f32 %v60, %v290
    %292 = vmatmul.bf16.gmra.mxu0 %v157
    %v293 = vpop.f32.mrf.mxu0
    %v294 = vadd.f32 %v60, %v293
    %v295 = vpop.f32.mrf.mxu0
    %v296 = vadd.f32 %v60, %v295
    %297 = vmatmul.bf16.gmra.mxu0 %v160
    %v298 = vpop.f32.mrf.mxu0
    %v299 = vadd.f32 %v60, %v298
    %v300 = vpop.f32.mrf.mxu0
    %v301 = vadd.f32 %v60, %v300
    %302 = vmatmul.bf16.gmra.mxu0 %v163
    %v303 = vpop.f32.mrf.mxu0
    %v304 = vadd.f32 %v60, %v303
    %v305 = vpop.f32.mrf.mxu0
    %v306 = vadd.f32 %v60, %v305
    %307 = vmatmul.bf16.gmra.mxu0 %v166
    %v308 = vpop.f32.mrf.mxu0
    %v309 = vadd.f32 %v60, %v308
    %v310 = vpop.f32.mrf.mxu0
    %v311 = vadd.f32 %v60, %v310
    %312 = vmatmul.bf16.gmra.mxu0 %v169
    %v313 = vpop.f32.mrf.mxu0
    %v314 = vadd.f32 %v60, %v313
    %v315 = vpop.f32.mrf.mxu0
    %v316 = vadd.f32 %v60, %v315
    %317 = vdwg.mxu0
    %318 = vmatpush.bf16.msra.mxu0 0
    %319 = vmatpush.bf16.msra.mxu0 0
    %320 = vmatpush.bf16.msra.mxu0 0
    %321 = vmatpush.bf16.msra.mxu0 0
    %322 = vmatpush.bf16.msra.mxu0 %v129
    %323 = vmatpush.bf16.msra.mxu0 %v125
    %324 = vmatpush.bf16.msra.mxu0 %v121
    %325 = vmatpush.bf16.msra.mxu0 %v117
    %326 = vmatmul.bf16.gmra.mxu0 %v148
    %v327 = vpop.f32.mrf.mxu0
    %v328 = vadd.f32 %v61, %v327
    %v329 = vpop.f32.mrf.mxu0
    %v330 = vadd.f32 %v61, %v329
    %331 = vmatmul.bf16.gmra.mxu0 %v151
    %v332 = vpop.f32.mrf.mxu0
    %v333 = vadd.f32 %v61, %v332
    %v334 = vpop.f32.mrf.mxu0
    %v335 = vadd.f32 %v61, %v334
    %336 = vmatmul.bf16.gmra.mxu0 %v154
    %v337 = vpop.f32.mrf.mxu0
    %v338 = vadd.f32 %v61, %v337
    %v339 = vpop.f32.mrf.mxu0
    %v340 = vadd.f32 %v61, %v339
    %341 = vmatmul.bf16.gmra.mxu0 %v157
    %v342 = vpop.f32.mrf.mxu0
    %v343 = vadd.f32 %v61, %v342
    %v344 = vpop.f32.mrf.mxu0
    %v345 = vadd.f32 %v61, %v344
    %346 = vmatmul.bf16.gmra.mxu0 %v160
    %v347 = vpop.f32.mrf.mxu0
    %v348 = vadd.f32 %v61, %v347
    %v349 = vpop.f32.mrf.mxu0
    %v350 = vadd.f32 %v61, %v349
    %351 = vmatmul.bf16.gmra.mxu0 %v163
    %v352 = vpop.f32.mrf.mxu0
    %v353 = vadd.f32 %v61, %v352
    %v354 = vpop.f32.mrf.mxu0
    %v355 = vadd.f32 %v61, %v354
    %356 = vmatmul.bf16.gmra.mxu0 %v166
    %v357 = vpop.f32.mrf.mxu0
    %v358 = vadd.f32 %v61, %v357
    %v359 = vpop.f32.mrf.mxu0
    %v360 = vadd.f32 %v61, %v359
    %361 = vmatmul.bf16.gmra.mxu0 %v169
    %v362 = vpop.f32.mrf.mxu0
    %v363 = vadd.f32 %v61, %v362
    %v364 = vpop.f32.mrf.mxu0
    %v365 = vadd.f32 %v61, %v364
    %366 = vdwg.mxu0
    %v367 = vpack.c.bf16 %v230, %v181
    %v368 = vpack.c.bf16 %v328, %v279
    %v369 = vpack.c.bf16 %v232, %v183
    %v370 = vpack.c.bf16 %v330, %v281
    %v371 = vpack.c.bf16 %v235, %v186
    %v372 = vpack.c.bf16 %v333, %v284
    %v373 = vpack.c.bf16 %v237, %v188
    %v374 = vpack.c.bf16 %v335, %v286
    %v375 = vpack.c.bf16 %v240, %v191
    %v376 = vpack.c.bf16 %v338, %v289
    %v377 = vpack.c.bf16 %v242, %v193
    %v378 = vpack.c.bf16 %v340, %v291
    %v379 = vpack.c.bf16 %v245, %v196
    %v380 = vpack.c.bf16 %v343, %v294
    %v381 = vpack.c.bf16 %v247, %v198
    %v382 = vpack.c.bf16 %v345, %v296
    %v383 = vpack.c.bf16 %v250, %v201
    %v384 = vpack.c.bf16 %v348, %v299
    %v385 = vpack.c.bf16 %v252, %v203
    %v386 = vpack.c.bf16 %v350, %v301
    %v387 = vpack.c.bf16 %v255, %v206
    %v388 = vpack.c.bf16 %v353, %v304
    %v389 = vpack.c.bf16 %v257, %v208
    %v390 = vpack.c.bf16 %v355, %v306
    %v391 = vpack.c.bf16 %v260, %v211
    %v392 = vpack.c.bf16 %v358, %v309
    %v393 = vpack.c.bf16 %v262, %v213
    %v394 = vpack.c.bf16 %v360, %v311
    %v395 = vpack.c.bf16 %v265, %v216
    %v396 = vpack.c.bf16 %v363, %v314
    %v397 = vpack.c.bf16 %v267, %v218
    %v398 = vpack.c.bf16 %v365, %v316
    %399 = vst [vmem:[#allocation2] sm:$0xff] %v367
    %400 = vst [vmem:[#allocation2 + $0x8] sm:$0xff] %v368
    %401 = vst [vmem:[#allocation2 + $0x10] sm:$0xff] %v369
    %402 = vst [vmem:[#allocation2 + $0x18] sm:$0xff] %v370
    %403 = vst [vmem:[#allocation2 + $0x20] sm:$0xff] %v371
    %404 = vst [vmem:[#allocation2 + $0x28] sm:$0xff] %v372
    %405 = vst [vmem:[#allocation2 + $0x30] sm:$0xff] %v373
    %406 = vst [vmem:[#allocation2 + $0x38] sm:$0xff] %v374
    %407 = vst [vmem:[#allocation2 + $0x40] sm:$0xff] %v375
    %408 = vst [vmem:[#allocation2 + $0x48] sm:$0xff] %v376
    %409 = vst [vmem:[#allocation2 + $0x50] sm:$0xff] %v377
    %410 = vst [vmem:[#allocation2 + $0x58] sm:$0xff] %v378
    %411 = vst [vmem:[#allocation2 + $0x60] sm:$0xff] %v379
    %412 = vst [vmem:[#allocation2 + $0x68] sm:$0xff] %v380
    %413 = vst [vmem:[#allocation2 + $0x70] sm:$0xff] %v381
    %414 = vst [vmem:[#allocation2 + $0x78] sm:$0xff] %v382
    %415 = vst [vmem:[#allocation2 + $0x80] sm:$0xff] %v383
    %416 = vst [vmem:[#allocation2 + $0x88] sm:$0xff] %v384
    %417 = vst [vmem:[#allocation2 + $0x90] sm:$0xff] %v385
    %418 = vst [vmem:[#allocation2 + $0x98] sm:$0xff] %v386
    %419 = vst [vmem:[#allocation2 + $0xa0] sm:$0xff] %v387
    %420 = vst [vmem:[#allocation2 + $0xa8] sm:$0xff] %v388
    %421 = vst [vmem:[#allocation2 + $0xb0] sm:$0xff] %v389
    %422 = vst [vmem:[#allocation2 + $0xb8] sm:$0xff] %v390
    %423 = vst [vmem:[#allocation2 + $0xc0] sm:$0xff] %v391
    %424 = vst [vmem:[#allocation2 + $0xc8] sm:$0xff] %v392
    %425 = vst [vmem:[#allocation2 + $0xd0] sm:$0xff] %v393
    %426 = vst [vmem:[#allocation2 + $0xd8] sm:$0xff] %v394
    %427 = vst [vmem:[#allocation2 + $0xe0] sm:$0xff] %v395
    %428 = vst [vmem:[#allocation2 + $0xe8] sm:$0xff] %v396
    %429 = vst [vmem:[#allocation2 + $0xf0] sm:$0xff] %v397
    %430 = vst [vmem:[#allocation2 + $0xf8] sm:$0xff] %v398
    // Predicated region
    $region14: #{tpu_custom_call.1} parent=1 // pred_check
      _
    $region15: #{tpu_custom_call.1} parent=1 // pred_check_branch
      %432 = sbr.rel (0) target = $region17
    $region16: #{tpu_custom_call.1} parent=1 // pred_region
      %434 = vsyncadd [#allocation3], 0
      %s435 = sshll.u32 [#allocation2], 4
      %s436 = int_to_ptr.vmem [resolvable:$true] %s435
      %s437 = sshll.u32 %s3, 4
      %s438 = int_to_ptr.hbm [resolvable:$true] %s437
      %443 = dma.vmem_to_hbm [thread:$0]  %s436, 4096, %s438, [#allocation3], 256, 256, 16
    $region17: #{tpu_custom_call.1} parent=1 // pred_fallthru
      _
    // Predicated region
    $region18: #{tpu_custom_call.1} parent=1 // pred_check
      _
    $region19: #{tpu_custom_call.1} parent=1 // pred_check_branch
      %445 = sbr.rel (0) target = $region21
    $region20: #{tpu_custom_call.1} parent=1 // pred_region
      %447 = dma.done [#allocation3], 4096
    $region21: #{tpu_custom_call.1} parent=1 // pred_fallthru
      _
    %448 = vsyncpa [#allocation3], 1

</llo_original>
